<compile_context>
chip_gen: v5e
topology: v5e:2x2
jax: 0.10.0
libtpu: 0.0.40
codegen_flags: <defaults>
</compile_context>

<pallas_src>
import functools

import jax
import jax.numpy as jnp
from jax.experimental import pallas as pl
from jax.experimental.pallas import tpu as pltpu


def _cross_attn_kernel(x_ref, ctx_ref, gamma_ref, wqkv_ref, wout_ref, o_ref, *,
                       heads, dim_head, matmul_dtype):
    Bt, N, D = x_ref.shape
    _, M, Dc = ctx_ref.shape
    inner = heads * dim_head

    # ---- LayerNorm (f32) over the whole (Bt*N, D) slab (beta buffer == 0). ----
    x = x_ref[...].reshape(Bt * N, D)                      # leading-dim merge only
    mean = jnp.mean(x, axis=-1, keepdims=True)
    var = jnp.mean(jnp.square(x - mean), axis=-1, keepdims=True)
    xn = (x - mean) * jax.lax.rsqrt(var + 1e-5) * gamma_ref[...]

    # ---- Fused q/k/v projection: ONE MXU call against the block-diagonal
    # weight [[Wq*scale, 0], [0, Wkv]] built in the wrapper.  Input rows are
    # [xn | 0] for x rows and [0 | ctx] for context rows (sublane-stacked).
    xn_c = xn.astype(matmul_dtype)
    ctx_c = ctx_ref[...].reshape(Bt * M, Dc)                       # matmul_dtype
    top = jnp.concatenate(
        [xn_c, jnp.zeros((Bt * N, Dc), matmul_dtype)], axis=-1)    # (Bt*N, D+Dc)
    bot = jnp.concatenate(
        [jnp.zeros((Bt * M, D), matmul_dtype), ctx_c], axis=-1)    # (Bt*M, D+Dc)
    stacked = jnp.concatenate([top, bot], axis=0)                  # (Bt*(N+M), D+Dc)
    proj = jnp.dot(stacked, wqkv_ref[...],
                   preferred_element_type=jnp.float32)   # (Bt*(N+M), inner+2*Dh)

    q = proj[:Bt * N, :inner]                             # (Bt*N, H*Dh)  f32
    k = proj[Bt * N:, inner:inner + dim_head]             # (Bt*M, Dh)    f32
    v = proj[Bt * N:, inner + dim_head:]                  # (Bt*M, Dh)    f32

    # ---- Head-major relayout of q entirely in registers: per-head lane slices
    # concatenated along sublanes -> row order (b, h*N + n).  No VMEM scratch.
    q3 = q.reshape(Bt, N, inner)
    q_hm = jnp.concatenate(
        [q3[:, :, h * dim_head:(h + 1) * dim_head] for h in range(heads)],
        axis=1).astype(matmul_dtype)                      # (Bt, H*N, Dh)

    k3 = k.reshape(Bt, M, dim_head).astype(matmul_dtype)
    v3 = v.reshape(Bt, M, dim_head).astype(matmul_dtype)

    # ---- Attention for all heads at once: one batched matmul per stage,
    # k / v shared across heads (multi-query style, no duplication).
    sim = jnp.einsum('bqd,bkd->bqk', q_hm, k3,
                     preferred_element_type=jnp.float32)  # (Bt, H*N, M)
    sim = sim - jnp.max(sim, axis=-1, keepdims=True)
    e = jnp.exp(sim)
    attn = e * pl.reciprocal(jnp.sum(e, axis=-1, keepdims=True), approx=True)
    out = jnp.einsum('bqk,bkd->bqd', attn.astype(matmul_dtype), v3,
                     preferred_element_type=jnp.float32)  # (Bt, H*N, Dh)

    # ---- Regroup heads back onto lanes in registers (per-head sublane slices
    # concatenated along lanes), then a single output-projection matmul.
    out_cat = jnp.concatenate(
        [out[:, h * N:(h + 1) * N, :] for h in range(heads)],
        axis=-1).reshape(Bt * N, inner).astype(matmul_dtype)   # (Bt*N, H*Dh)
    y = jnp.dot(out_cat, wout_ref[...],
                preferred_element_type=jnp.float32)            # (Bt*N, D)

    # ---- Lane-dense writeback: pack the N rows of each batch onto lanes so
    # the output slab is (Bt, 1, N*D) with N*D a multiple of 128 lanes.
    y3 = y.reshape(Bt, N, D)
    o_ref[...] = jnp.concatenate(
        [y3[:, n:n + 1, :] for n in range(N)], axis=-1)        # (Bt, 1, N*D)

    # TODO(synk): optional `mask` argument (masked_fill with -inf before softmax)
    # and the parallel_ff / norm_context branches are not wired in; this matches
    # the module defaults (mask=None, parallel_ff=False, norm_context=False).


def cross_attention_pallas(x, context, gamma, wq, wkv, wout, *, heads, dim_head,
                           matmul_dtype=jnp.bfloat16, batch_blocks=1):
    """x: (B, N, D) f32, context: (B, M, Dc) f32, gamma: (D,).  Weights are
    stored (in_features, out_features) so y = x @ W.

    batch_blocks: number of grid steps over the batch.  1 (default) amortizes
    per-step overhead best on v5e/v6e; 2 is only worth measuring on v7x
    (2 TensorCores) once B and N*M are large enough to cover the extra step.
    """
    B, N, D = x.shape
    _, M, Dc = context.shape
    inner = heads * dim_head
    scale = dim_head ** -0.5
    assert B % batch_blocks == 0
    bt = B // batch_blocks

    # One-time wrapper-side parameter transforms (exact in f32):
    #  * fold the query scale into Wq,
    #  * build the block-diagonal projection weight [[Wq*scale, 0], [0, Wkv]]
    #    so q, k, v come from a single MXU call in the kernel,
    #  * cast MXU operands to matmul_dtype (context's only use is a matmul, so
    #    casting it here also halves its DMA bytes).  x stays f32 for LayerNorm.
    w_qkv = jnp.zeros((D + Dc, inner + 2 * dim_head), jnp.float32)
    w_qkv = w_qkv.at[:D, :inner].set(wq.astype(jnp.float32) * scale)
    w_qkv = w_qkv.at[D:, inner:].set(wkv.astype(jnp.float32))
    w_qkv = w_qkv.astype(matmul_dtype)
    wout_c = wout.astype(matmul_dtype)
    ctx_c = context.astype(matmul_dtype)
    gamma2 = gamma.reshape(1, D).astype(jnp.float32)

    kernel = functools.partial(_cross_attn_kernel, heads=heads,
                               dim_head=dim_head, matmul_dtype=matmul_dtype)

    out_dense = pl.pallas_call(
        kernel,
        out_shape=jax.ShapeDtypeStruct((B, 1, N * D), jnp.float32),
        grid_spec=pltpu.PrefetchScalarGridSpec(
            num_scalar_prefetch=0,
            grid=(batch_blocks,),
            in_specs=[
                pl.BlockSpec((bt, N, D), lambda i: (i, 0, 0)),        # x (f32)
                pl.BlockSpec((bt, M, Dc), lambda i: (i, 0, 0)),       # context
                pl.BlockSpec((1, D), lambda i: (0, 0)),               # gamma
                pl.BlockSpec((D + Dc, inner + 2 * dim_head),
                             lambda i: (0, 0)),                       # [[Wq,0],[0,Wkv]]
                pl.BlockSpec((inner, D), lambda i: (0, 0)),           # Wout
            ],
            out_specs=pl.BlockSpec((bt, 1, N * D), lambda i: (i, 0, 0)),
        ),
        compiler_params=pltpu.CompilerParams(
            dimension_semantics=("parallel",)),
    )(x, ctx_c, gamma2, w_qkv, wout_c)
    # Lane-dense kernel output -> (B, N, D); contiguous, so this reshape is free.
    return out_dense.reshape(B, N, D)


def cross_attention_ref(x, context, gamma, wq, wkv, wout, *, heads, dim_head):
    """Pure-JAX f32 reference mirroring the PyTorch forward (mask=None, no ff)."""
    scale = dim_head ** -0.5
    mean = jnp.mean(x, axis=-1, keepdims=True)
    var = jnp.mean(jnp.square(x - mean), axis=-1, keepdims=True)
    xn = (x - mean) / jnp.sqrt(var + 1e-5) * gamma
    q = (xn @ wq) * scale                                        # (B, N, H*Dh)
    B, N, _ = q.shape
    q = q.reshape(B, N, heads, dim_head).transpose(0, 2, 1, 3)   # (B, H, N, Dh)
    kv = context @ wkv
    k, v = kv[..., :dim_head], kv[..., dim_head:]                # (B, M, Dh)
    sim = jnp.einsum('bhid,bjd->bhij', q, k)
    sim = sim - jnp.max(sim, axis=-1, keepdims=True)
    attn = jax.nn.softmax(sim, axis=-1)
    out = jnp.einsum('bhij,bjd->bhid', attn, v)
    out = out.transpose(0, 2, 1, 3).reshape(B, N, heads * dim_head)
    return out @ wout


if __name__ == "__main__":
    # Small config consistent with the module: dim=32, heads=4, dim_head=16.
    B, N, M = 2, 8, 8
    dim, heads, dim_head = 32, 4, 16
    context_dim = dim
    inner = heads * dim_head

    key = jax.random.PRNGKey(0)
    kx, kc, kq, kkv, ko = jax.random.split(key, 5)
    x = jax.random.normal(kx, (B, N, dim), dtype=jnp.float32)
    context = jax.random.normal(kc, (B, M, context_dim), dtype=jnp.float32)

    gamma = jnp.ones((dim,), dtype=jnp.float32)  # LayerNorm init (beta buffer = 0)
    wq = jax.random.normal(kq, (dim, inner), dtype=jnp.float32) * (dim ** -0.5)
    wkv = jax.random.normal(kkv, (context_dim, 2 * dim_head), dtype=jnp.float32) * (context_dim ** -0.5)
    wout = jax.random.normal(ko, (inner, dim), dtype=jnp.float32) * (inner ** -0.5)

    ref = cross_attention_ref(x, context, gamma, wq, wkv, wout,
                              heads=heads, dim_head=dim_head)

    # f32 MXU operands: near-exact check (only approx reciprocal differs).
    out_f32 = jax.block_until_ready(cross_attention_pallas(
        x, context, gamma, wq, wkv, wout, heads=heads, dim_head=dim_head,
        matmul_dtype=jnp.float32))
    assert out_f32.shape == (B, N, dim)
    assert jnp.allclose(out_f32, ref, atol=1e-2, rtol=1e-2), "f32 mismatch vs reference"

    # bf16 MXU operands with f32 accumulation — the intended perf configuration.
    out_bf16 = jax.block_until_ready(cross_attention_pallas(
        x, context, gamma, wq, wkv, wout, heads=heads, dim_head=dim_head,
        matmul_dtype=jnp.bfloat16))
    assert out_bf16.shape == (B, N, dim)
    assert jnp.allclose(out_bf16, ref, atol=5e-2, rtol=5e-2), "bf16 mismatch vs reference"

    print("KERNEL_OK")
</pallas_src>

<mosaic_0001>
module attributes {stable_mosaic.version = 11 : i64} {
  func.func @_cross_attn_kernel(%arg0: i32, %arg1: memref<2x8x32xf32, #tpu.memory_space<vmem>>, %arg2: memref<2x8x32xf32, #tpu.memory_space<vmem>>, %arg3: memref<1x32xf32, #tpu.memory_space<vmem>>, %arg4: memref<64x96xf32, #tpu.memory_space<vmem>>, %arg5: memref<64x32xf32, #tpu.memory_space<vmem>>, %arg6: memref<2x1x256xf32, #tpu.memory_space<vmem>>) attributes {dimension_semantics = [#tpu.dimension_semantics<parallel>], iteration_bounds = array<i64: 1>, scalar_prefetch = 0 : i64, scratch_operands = 0 : i64, tpu.core_type = #tpu.core_type<tc>, window_params = [{transform_indices = @transform_0, window_bounds = array<i64: 2, 8, 32>}, {transform_indices = @transform_1, window_bounds = array<i64: 2, 8, 32>}, {pipeline_mode = #tpu.pipeline_mode<synchronous>, transform_indices = @transform_2, window_bounds = array<i64: 1, 32>}, {pipeline_mode = #tpu.pipeline_mode<synchronous>, transform_indices = @transform_3, window_bounds = array<i64: 64, 96>}, {pipeline_mode = #tpu.pipeline_mode<synchronous>, transform_indices = @transform_4, window_bounds = array<i64: 64, 32>}, {transform_indices = @transform_5, window_bounds = array<i64: 2, 1, 256>}]} {
    %c0 = arith.constant 0 : index
    %c0_0 = arith.constant 0 : index
    %c0_1 = arith.constant 0 : index
    %0 = vector.load %arg1[%c0, %c0_0, %c0_1] : memref<2x8x32xf32, #tpu.memory_space<vmem>>, vector<2x8x32xf32>
    %1 = vector.shape_cast %0 : vector<2x8x32xf32> to vector<16x32xf32>
    %cst = arith.constant dense<0.000000e+00> : vector<16xf32>
    %2 = vector.multi_reduction <add>, %1, %cst [1] : vector<16x32xf32> to vector<16xf32>
    %3 = vector.shape_cast %2 : vector<16xf32> to vector<16x1xf32>
    %cst_2 = arith.constant 3.200000e+01 : f32
    %4 = vector.broadcast %cst_2 : f32 to vector<16x1xf32>
    %5 = arith.divf %3, %4 : vector<16x1xf32>
    %6 = vector.broadcast %5 : vector<16x1xf32> to vector<16x32xf32>
    %7 = arith.subf %1, %6 : vector<16x32xf32>
    %8 = arith.mulf %7, %7 : vector<16x32xf32>
    %cst_3 = arith.constant dense<0.000000e+00> : vector<16xf32>
    %9 = vector.multi_reduction <add>, %8, %cst_3 [1] : vector<16x32xf32> to vector<16xf32>
    %10 = vector.shape_cast %9 : vector<16xf32> to vector<16x1xf32>
    %cst_4 = arith.constant 3.200000e+01 : f32
    %11 = vector.broadcast %cst_4 : f32 to vector<16x1xf32>
    %12 = arith.divf %10, %11 : vector<16x1xf32>
    %13 = vector.broadcast %5 : vector<16x1xf32> to vector<16x32xf32>
    %14 = arith.subf %1, %13 : vector<16x32xf32>
    %cst_5 = arith.constant 9.99999974E-6 : f32
    %15 = vector.broadcast %cst_5 : f32 to vector<16x1xf32>
    %16 = arith.addf %12, %15 : vector<16x1xf32>
    %17 = math.rsqrt %16 : vector<16x1xf32>
    %18 = vector.broadcast %17 : vector<16x1xf32> to vector<16x32xf32>
    %19 = arith.mulf %14, %18 : vector<16x32xf32>
    %c0_6 = arith.constant 0 : index
    %c0_7 = arith.constant 0 : index
    %20 = vector.load %arg3[%c0_6, %c0_7] : memref<1x32xf32, #tpu.memory_space<vmem>>, vector<1x32xf32>
    %21 = vector.broadcast %20 : vector<1x32xf32> to vector<16x32xf32>
    %22 = arith.mulf %19, %21 : vector<16x32xf32>
    %c0_8 = arith.constant 0 : index
    %c0_9 = arith.constant 0 : index
    %c0_10 = arith.constant 0 : index
    %23 = vector.load %arg2[%c0_8, %c0_9, %c0_10] : memref<2x8x32xf32, #tpu.memory_space<vmem>>, vector<2x8x32xf32>
    %24 = vector.shape_cast %23 : vector<2x8x32xf32> to vector<16x32xf32>
    %cst_11 = arith.constant 0.000000e+00 : f32
    %25 = vector.broadcast %cst_11 : f32 to vector<16x32xf32>
    %26 = tpu.concatenate %22, %25 in 1 : vector<16x32xf32>, vector<16x32xf32> -> vector<16x64xf32>
    %cst_12 = arith.constant 0.000000e+00 : f32
    %27 = vector.broadcast %cst_12 : f32 to vector<16x32xf32>
    %28 = tpu.concatenate %27, %24 in 1 : vector<16x32xf32>, vector<16x32xf32> -> vector<16x64xf32>
    %29 = tpu.concatenate %26, %28 in 0 : vector<16x64xf32>, vector<16x64xf32> -> vector<32x64xf32>
    %c0_13 = arith.constant 0 : index
    %c0_14 = arith.constant 0 : index
    %30 = vector.load %arg4[%c0_13, %c0_14] : memref<64x96xf32, #tpu.memory_space<vmem>>, vector<64x96xf32>
    %cst_15 = arith.constant dense<0.000000e+00> : vector<32x96xf32>
    %31 = tpu.matmul %29, %30, %cst_15 {dimension_numbers = #tpu.dot_dimension_numbers<[1], [0], [0], [1], [0, 0, 1, 1], [], []>} : vector<32x64xf32>, vector<64x96xf32>, vector<32x96xf32> -> vector<32x96xf32>
    %32 = vector.extract_strided_slice %31 {offsets = [0, 0], sizes = [16, 64], strides = [1, 1]} : vector<32x96xf32> to vector<16x64xf32>
    %33 = vector.extract_strided_slice %31 {offsets = [16, 64], sizes = [16, 16], strides = [1, 1]} : vector<32x96xf32> to vector<16x16xf32>
    %34 = vector.extract_strided_slice %31 {offsets = [16, 80], sizes = [16, 16], strides = [1, 1]} : vector<32x96xf32> to vector<16x16xf32>
    %35 = vector.shape_cast %32 : vector<16x64xf32> to vector<2x8x64xf32>
    %36 = vector.extract_strided_slice %35 {offsets = [0, 0, 0], sizes = [2, 8, 16], strides = [1, 1, 1]} : vector<2x8x64xf32> to vector<2x8x16xf32>
    %37 = vector.extract_strided_slice %35 {offsets = [0, 0, 16], sizes = [2, 8, 16], strides = [1, 1, 1]} : vector<2x8x64xf32> to vector<2x8x16xf32>
    %38 = vector.extract_strided_slice %35 {offsets = [0, 0, 32], sizes = [2, 8, 16], strides = [1, 1, 1]} : vector<2x8x64xf32> to vector<2x8x16xf32>
    %39 = vector.extract_strided_slice %35 {offsets = [0, 0, 48], sizes = [2, 8, 16], strides = [1, 1, 1]} : vector<2x8x64xf32> to vector<2x8x16xf32>
    %40 = tpu.concatenate %36, %37, %38, %39 in 1 : vector<2x8x16xf32>, vector<2x8x16xf32>, vector<2x8x16xf32>, vector<2x8x16xf32> -> vector<2x32x16xf32>
    %41 = vector.shape_cast %33 : vector<16x16xf32> to vector<2x8x16xf32>
    %42 = vector.shape_cast %34 : vector<16x16xf32> to vector<2x8x16xf32>
    "tpu.trace_start"() <{level = 10 : i32, message = "bqd,bkd->bqk"}> : () -> ()
    %cst_16 = arith.constant dense<0.000000e+00> : vector<2x32x8xf32>
    %43 = tpu.matmul %40, %41, %cst_16 {dimension_numbers = #tpu.dot_dimension_numbers<[2], [2], [1], [1], [0, 0, 0, 1, 1, 1], [0], [0]>} : vector<2x32x16xf32>, vector<2x8x16xf32>, vector<2x32x8xf32> -> vector<2x32x8xf32>
    "tpu.trace_stop"() : () -> ()
    %cst_17 = arith.constant dense<0xFF800000> : vector<2x32xf32>
    %44 = vector.multi_reduction <maximumf>, %43, %cst_17 [2] : vector<2x32x8xf32> to vector<2x32xf32>
    %45 = vector.shape_cast %44 : vector<2x32xf32> to vector<2x32x1xf32>
    %46 = vector.broadcast %45 : vector<2x32x1xf32> to vector<2x32x8xf32>
    %47 = arith.subf %43, %46 : vector<2x32x8xf32>
    %48 = math.exp %47 : vector<2x32x8xf32>
    %cst_18 = arith.constant dense<0.000000e+00> : vector<2x32xf32>
    %49 = vector.multi_reduction <add>, %48, %cst_18 [2] : vector<2x32x8xf32> to vector<2x32xf32>
    %50 = vector.shape_cast %49 : vector<2x32xf32> to vector<2x32x1xf32>
    %51 = tpu.reciprocal %50 {approx = true} : vector<2x32x1xf32> -> vector<2x32x1xf32>
    %52 = vector.broadcast %51 : vector<2x32x1xf32> to vector<2x32x8xf32>
    %53 = arith.mulf %48, %52 : vector<2x32x8xf32>
    "tpu.trace_start"() <{level = 10 : i32, message = "bqk,bkd->bqd"}> : () -> ()
    %cst_19 = arith.constant dense<0.000000e+00> : vector<2x32x16xf32>
    %54 = tpu.matmul %53, %42, %cst_19 {dimension_numbers = #tpu.dot_dimension_numbers<[2], [1], [1], [2], [0, 0, 0, 1, 1, 2], [0], [0]>} : vector<2x32x8xf32>, vector<2x8x16xf32>, vector<2x32x16xf32> -> vector<2x32x16xf32>
    "tpu.trace_stop"() : () -> ()
    %55 = vector.extract_strided_slice %54 {offsets = [0, 0, 0], sizes = [2, 8, 16], strides = [1, 1, 1]} : vector<2x32x16xf32> to vector<2x8x16xf32>
    %56 = vector.extract_strided_slice %54 {offsets = [0, 8, 0], sizes = [2, 8, 16], strides = [1, 1, 1]} : vector<2x32x16xf32> to vector<2x8x16xf32>
    %57 = vector.extract_strided_slice %54 {offsets = [0, 16, 0], sizes = [2, 8, 16], strides = [1, 1, 1]} : vector<2x32x16xf32> to vector<2x8x16xf32>
    %58 = vector.extract_strided_slice %54 {offsets = [0, 24, 0], sizes = [2, 8, 16], strides = [1, 1, 1]} : vector<2x32x16xf32> to vector<2x8x16xf32>
    %59 = tpu.concatenate %55, %56, %57, %58 in 2 : vector<2x8x16xf32>, vector<2x8x16xf32>, vector<2x8x16xf32>, vector<2x8x16xf32> -> vector<2x8x64xf32>
    %60 = vector.shape_cast %59 : vector<2x8x64xf32> to vector<16x64xf32>
    %c0_20 = arith.constant 0 : index
    %c0_21 = arith.constant 0 : index
    %61 = vector.load %arg5[%c0_20, %c0_21] : memref<64x32xf32, #tpu.memory_space<vmem>>, vector<64x32xf32>
    %cst_22 = arith.constant dense<0.000000e+00> : vector<16x32xf32>
    %62 = tpu.matmul %60, %61, %cst_22 {dimension_numbers = #tpu.dot_dimension_numbers<[1], [0], [0], [1], [0, 0, 1, 1], [], []>} : vector<16x64xf32>, vector<64x32xf32>, vector<16x32xf32> -> vector<16x32xf32>
    %63 = vector.shape_cast %62 : vector<16x32xf32> to vector<2x8x32xf32>
    %64 = vector.extract_strided_slice %63 {offsets = [0, 0, 0], sizes = [2, 1, 32], strides = [1, 1, 1]} : vector<2x8x32xf32> to vector<2x1x32xf32>
    %65 = vector.extract_strided_slice %63 {offsets = [0, 1, 0], sizes = [2, 1, 32], strides = [1, 1, 1]} : vector<2x8x32xf32> to vector<2x1x32xf32>
    %66 = vector.extract_strided_slice %63 {offsets = [0, 2, 0], sizes = [2, 1, 32], strides = [1, 1, 1]} : vector<2x8x32xf32> to vector<2x1x32xf32>
    %67 = vector.extract_strided_slice %63 {offsets = [0, 3, 0], sizes = [2, 1, 32], strides = [1, 1, 1]} : vector<2x8x32xf32> to vector<2x1x32xf32>
    %68 = vector.extract_strided_slice %63 {offsets = [0, 4, 0], sizes = [2, 1, 32], strides = [1, 1, 1]} : vector<2x8x32xf32> to vector<2x1x32xf32>
    %69 = vector.extract_strided_slice %63 {offsets = [0, 5, 0], sizes = [2, 1, 32], strides = [1, 1, 1]} : vector<2x8x32xf32> to vector<2x1x32xf32>
    %70 = vector.extract_strided_slice %63 {offsets = [0, 6, 0], sizes = [2, 1, 32], strides = [1, 1, 1]} : vector<2x8x32xf32> to vector<2x1x32xf32>
    %71 = vector.extract_strided_slice %63 {offsets = [0, 7, 0], sizes = [2, 1, 32], strides = [1, 1, 1]} : vector<2x8x32xf32> to vector<2x1x32xf32>
    %72 = tpu.concatenate %64, %65, %66, %67, %68, %69, %70, %71 in 2 : vector<2x1x32xf32>, vector<2x1x32xf32>, vector<2x1x32xf32>, vector<2x1x32xf32>, vector<2x1x32xf32>, vector<2x1x32xf32>, vector<2x1x32xf32>, vector<2x1x32xf32> -> vector<2x1x256xf32>
    %c0_23 = arith.constant 0 : index
    %c0_24 = arith.constant 0 : index
    %c0_25 = arith.constant 0 : index
    %73 = vector.load %arg6[%c0_23, %c0_24, %c0_25] : memref<2x1x256xf32, #tpu.memory_space<vmem>>, vector<2x1x256xf32>
    tpu.vector_store %arg6[%c0_23, %c0_24, %c0_25], %72 {strides = array<i32>} : memref<2x1x256xf32, #tpu.memory_space<vmem>>, vector<2x1x256xf32>,
    return
  }
  func.func @transform_0(%arg0: i32) -> (i32, i32, i32) {
    %c0_i32 = arith.constant 0 : i32
    %c0_i32_0 = arith.constant 0 : i32
    %c0_i32_1 = arith.constant 0 : i32
    return %arg0, %c0_i32, %c0_i32_0 : i32, i32, i32
  }
  func.func @transform_1(%arg0: i32) -> (i32, i32, i32) {
    %c0_i32 = arith.constant 0 : i32
    %c0_i32_0 = arith.constant 0 : i32
    %c0_i32_1 = arith.constant 0 : i32
    return %arg0, %c0_i32, %c0_i32_0 : i32, i32, i32
  }
  func.func @transform_2(%arg0: i32) -> (i32, i32) {
    %c0_i32 = arith.constant 0 : i32
    %c0_i32_0 = arith.constant 0 : i32
    %c0_i32_1 = arith.constant 0 : i32
    return %c0_i32, %c0_i32_0 : i32, i32
  }
  func.func @transform_3(%arg0: i32) -> (i32, i32) {
    %c0_i32 = arith.constant 0 : i32
    %c0_i32_0 = arith.constant 0 : i32
    %c0_i32_1 = arith.constant 0 : i32
    return %c0_i32, %c0_i32_0 : i32, i32
  }
  func.func @transform_4(%arg0: i32) -> (i32, i32) {
    %c0_i32 = arith.constant 0 : i32
    %c0_i32_0 = arith.constant 0 : i32
    %c0_i32_1 = arith.constant 0 : i32
    return %c0_i32, %c0_i32_0 : i32, i32
  }
  func.func @transform_5(%arg0: i32) -> (i32, i32, i32) {
    %c0_i32 = arith.constant 0 : i32
    %c0_i32_0 = arith.constant 0 : i32
    %c0_i32_1 = arith.constant 0 : i32
    return %arg0, %c0_i32, %c0_i32_0 : i32, i32, i32
  }
}

</mosaic_0001>

<llo_original>
// kernel: tpu_custom_call.1
$region0: #{tpu_custom_call.1}
  #allocation0 [shape = 'u32[]', space=smem, size = 0x4, offset = 0x4, fixed_abs, tag = 'smem constant byte address 0x4 - core index']
  #allocation1 [shape = 'u32[72,128]{1,0:T(1,128)}', space=vmem, size = 0x9000, scoped, tag = 'internal scratch']
  %s0 = inlined_call_operand.vmem [shape: f32[2,8,32], index: 0, kind: input, shape index: {}]
  %s1 = inlined_call_operand.vmem [shape: f32[2,8,32], index: 1, kind: input, shape index: {}]
  %s2 = inlined_call_operand.vmem [shape: f32[1,32], index: 2, kind: input, shape index: {}]
  %s3 = inlined_call_operand.vmem [shape: f32[64,96], index: 3, kind: input, shape index: {}]
  %s4 = inlined_call_operand.vmem [shape: f32[64,32], index: 4, kind: input, shape index: {}]
  %s5 = inlined_call_operand.hbm [shape: f32[2,1,256], index: 5, kind: output, shape index: {}]
  %s6 = sld [smem:[#allocation0]]
  $region30: #{tpu_custom_call.1} parent=0
    _
  %s8 = ssub.s32 1, %s6
  %s9 = scalar_select 0, %s8, %s6
  $region1: #{tpu_custom_call.1} parent=0
    #allocation2 [shape = 'u8[2048]{0}', space=vmem, size = 0x800, scoped, tag = 'output window, operand 0, single buffered']
    #allocation3 [shape = 's32[1]{0}', space=sflag, size = 0x4, scoped, tag = 'scoped memory for tpu_custom_call.1']
    %10 = vsyncpa [#allocation3], 0
    // Predicated region
    $region2: #{tpu_custom_call.1} parent=1 // pred_check
      _
    $region3: #{tpu_custom_call.1} parent=1 // pred_check_branch
      %12 = sbr.rel (0) target = $region5
    $region4: #{tpu_custom_call.1} parent=1 // pred_region
      _
    $region5: #{tpu_custom_call.1} parent=1 // pred_fallthru
      _
    // Predicated region
    $region6: #{tpu_custom_call.1} parent=1 // pred_check
      _
    $region7: #{tpu_custom_call.1} parent=1 // pred_check_branch
      %14 = sbr.rel (0) target = $region9
    $region8: #{tpu_custom_call.1} parent=1 // pred_region
      _
    $region9: #{tpu_custom_call.1} parent=1 // pred_fallthru
      _
    // Predicated region
    $region10: #{tpu_custom_call.1} parent=1 // pred_check
      _
    $region11: #{tpu_custom_call.1} parent=1 // pred_check_branch
      %16 = sbr.rel (0) target = $region13
    $region12: #{tpu_custom_call.1} parent=1 // pred_region
      _
    $region13: #{tpu_custom_call.1} parent=1 // pred_fallthru
      _
    // Predicated region
    $region14: #{tpu_custom_call.1} parent=1 // pred_check
      _
    $region15: #{tpu_custom_call.1} parent=1 // pred_check_branch
      %18 = sbr.rel (0) target = $region17
    $region16: #{tpu_custom_call.1} parent=1 // pred_region
      _
    $region17: #{tpu_custom_call.1} parent=1 // pred_fallthru
      _
    // Predicated region
    $region18: #{tpu_custom_call.1} parent=1 // pred_check
      _
    $region19: #{tpu_custom_call.1} parent=1 // pred_check_branch
      %20 = sbr.rel (0) target = $region21
    $region20: #{tpu_custom_call.1} parent=1 // pred_region
      _
    $region21: #{tpu_custom_call.1} parent=1 // pred_fallthru
      _
    %v21 = vld [vmem:[%s0] sm:$0xff]
    %v22 = vld [vmem:[%s0 + $0x8] sm:$0xff]
    %vm23 = vcmask 261120
    %v24 = vsel %vm23, %v21, 0.0
    %25 = vadd.xlane.f32.xlu0 %v24
    %v26 = vpop.xlane.xlu0 %25
    %v27 = vsel %vm23, %v22, 0.0
    %28 = vadd.xlane.f32.xlu0 %v27
    %v29 = vpop.xlane.xlu0 %28
    %v30 = vrcp.pop 32.0
    %v31 = vmul.f32 32.0, %v30
    %v32 = vsub.f32 1.0, %v31
    %v33 = vmul.f32 %v30, %v32
    %v34 = vadd.f32 %v30, %v33
    %vm35 = vweird.f32 %v30
    %v36 = vsel %vm35, %v30, %v34
    %v37 = vmul.f32 %v26, %v36
    %v38 = vmul.f32 %v29, %v36
    %v39 = vsub.f32 %v21, %v37
    %v40 = vsub.f32 %v22, %v38
    %v41 = vmul.f32 %v39, %v39
    %v42 = vmul.f32 %v40, %v40
    %v43 = vsel %vm23, %v41, 0.0
    %44 = vadd.xlane.f32.xlu0 %v43
    %v45 = vpop.xlane.xlu0 %44
    %v46 = vsel %vm23, %v42, 0.0
    %47 = vadd.xlane.f32.xlu0 %v46
    %v48 = vpop.xlane.xlu0 %47
    %v49 = vmul.f32 %v45, %v36
    %v50 = vmul.f32 %v48, %v36
    %v51 = vadd.f32 %v49, 1e-05
    %v52 = vadd.f32 %v50, 1e-05
    %v53 = vrsqrt.pop %v51
    %v54 = vmul.f32 %v53, %v51
    %v55 = vmul.f32 %v54, %v53
    %v56 = vmul.f32 0.5, %v55
    %v57 = vsub.f32 1.5, %v56
    %v58 = vmul.f32 %v53, %v57
    %vm59 = vweird.f32 %v51
    %vm60 = vweird.f32 %v53
    %vm61 = vmor %vm59, %vm60
    %v62 = vsel %vm61, %v53, %v58
    %v63 = vrsqrt.pop %v52
    %v64 = vmul.f32 %v63, %v52
    %v65 = vmul.f32 %v64, %v63
    %v66 = vmul.f32 0.5, %v65
    %v67 = vsub.f32 1.5, %v66
    %v68 = vmul.f32 %v63, %v67
    %vm69 = vweird.f32 %v52
    %vm70 = vweird.f32 %v63
    %vm71 = vmor %vm69, %vm70
    %v72 = vsel %vm71, %v63, %v68
    %v73 = vmul.f32 %v39, %v62
    %v74 = vmul.f32 %v40, %v72
    %v75 = vld [vmem:[%s2] sm:$0x1]
    %v77 = vperm.slane %v75, 0
    %v79 = vmul.f32 %v73, %v77
    %v80 = vmul.f32 %v74, %v77
    %v81 = vld [vmem:[%s1] sm:$0xff]
    %v82 = vld [vmem:[%s1 + $0x8] sm:$0xff]
    %v83 = vsel %vm23, %v79, 0.0
    %v84 = vsel %vm23, %v80, 0.0
    %87 = vrot.lane.b32.xlu0 %v81, 32
    %v88 = vpop.permute.xlu0 %87
    %89 = vrot.lane.b32.xlu0 %v82, 32
    %v90 = vpop.permute.xlu0 %89
    %v93 = vsel %vm23, 0.0, %v88
    %v94 = vsel %vm23, 0.0, %v90
    %v95 = vld [vmem:[%s3] sm:$0xff]
    %v96 = vld [vmem:[%s3 + $0x8] sm:$0xff]
    %v97 = vld [vmem:[%s3 + $0x10] sm:$0xff]
    %v98 = vld [vmem:[%s3 + $0x18] sm:$0xff]
    %v99 = vld [vmem:[%s3 + $0x20] sm:$0xff]
    %v100 = vld [vmem:[%s3 + $0x28] sm:$0xff]
    %v101 = vld [vmem:[%s3 + $0x30] sm:$0xff]
    %v102 = vld [vmem:[%s3 + $0x38] sm:$0xff]
    %vm103 = vcmask 523264
    %v105 = vsel %vm103, %v83, 0
    %v108 = vsel %vm103, %v84, 0
    %v111 = vsel %vm103, %v93, 0
    %v114 = vsel %vm103, %v94, 0
    %116 = vmatpush.msra.mxu0 0.0
    %117 = vmatpush.msra.mxu0 0.0
    %118 = vmatpush.msra.mxu0 0.0
    %119 = vmatpush.msra.mxu0 0.0
    %120 = vmatpush.msra.mxu0 0.0
    %121 = vmatpush.msra.mxu0 0.0
    %122 = vmatpush.msra.mxu0 0.0
    %123 = vmatpush.msra.mxu0 0.0
    %124 = vmatpush.msra.mxu0 %v102
    %125 = vmatpush.msra.mxu0 %v101
    %126 = vmatpush.msra.mxu0 %v100
    %127 = vmatpush.msra.mxu0 %v99
    %128 = vmatpush.msra.mxu0 %v98
    %129 = vmatpush.msra.mxu0 %v97
    %130 = vmatpush.msra.mxu0 %v96
    %131 = vmatpush.msra.mxu0 %v95
    %132 = vmatmul.f32.gmra.mxu0 %v105
    %v133 = vpop.f32.mrf.mxu0
    %v134 = vadd.f32 0.0, %v133
    %135 = vmatmul.f32.gmra.mxu0 %v108
    %v136 = vpop.f32.mrf.mxu0
    %v137 = vadd.f32 0.0, %v136
    %138 = vmatmul.f32.gmra.mxu0 %v111
    %v139 = vpop.f32.mrf.mxu0
    %v140 = vadd.f32 0.0, %v139
    %141 = vmatmul.f32.gmra.mxu0 %v114
    %v142 = vpop.f32.mrf.mxu0
    %v143 = vadd.f32 0.0, %v142
    %144 = vdwg.mxu0
    %147 = vrot.lane.b32.xlu0 %v134, 112
    %v148 = vpop.permute.xlu0 %147
    %149 = vrot.lane.b32.xlu0 %v137, 112
    %v150 = vpop.permute.xlu0 %149
    %151 = vrot.lane.b32.xlu0 %v134, 96
    %v152 = vpop.permute.xlu0 %151
    %153 = vrot.lane.b32.xlu0 %v137, 96
    %v154 = vpop.permute.xlu0 %153
    %155 = vrot.lane.b32.xlu0 %v134, 80
    %v156 = vpop.permute.xlu0 %155
    %157 = vrot.lane.b32.xlu0 %v137, 80
    %v158 = vpop.permute.xlu0 %157
    %160 = vrot.lane.b32.xlu0 %v140, 64
    %v161 = vpop.permute.xlu0 %160
    %vm162 = vcmask 130048
    %v163 = vsel %vm162, %v134, 0
    %v165 = vsel %vm162, %v148, 0
    %v167 = vsel %vm162, %v152, 0
    %v169 = vsel %vm162, %v156, 0
    %v171 = vsel %vm162, %v161, 0
    %173 = vmatpush.xpose.msra.mxu0 0.0
    %174 = vmatpush.xpose.msra.mxu0 0.0
    %175 = vmatpush.xpose.msra.mxu0 0.0
    %176 = vmatpush.xpose.msra.mxu0 0.0
    %177 = vmatpush.xpose.msra.mxu0 0.0
    %178 = vmatpush.xpose.msra.mxu0 0.0
    %179 = vmatpush.xpose.msra.mxu0 0.0
    %180 = vmatpush.xpose.msra.mxu0 0.0
    %181 = vmatpush.xpose.msra.mxu0 0.0
    %182 = vmatpush.xpose.msra.mxu0 0.0
    %183 = vmatpush.xpose.msra.mxu0 0.0
    %184 = vmatpush.xpose.msra.mxu0 0.0
    %185 = vmatpush.xpose.msra.mxu0 0.0
    %186 = vmatpush.xpose.msra.mxu0 0.0
    %187 = vmatpush.xpose.msra.mxu0 0.0
    %188 = vmatpush.xpose.msra.mxu0 %v171
    %189 = vmatmul.f32.gmra.mxu0 %v163
    %v190 = vpop.f32.mrf.mxu0
    %v191 = vadd.f32 0.0, %v190
    %192 = vmatmul.f32.gmra.mxu0 %v165
    %v193 = vpop.f32.mrf.mxu0
    %v194 = vadd.f32 0.0, %v193
    %195 = vmatmul.f32.gmra.mxu0 %v167
    %v196 = vpop.f32.mrf.mxu0
    %v197 = vadd.f32 0.0, %v196
    %198 = vmatmul.f32.gmra.mxu0 %v169
    %v199 = vpop.f32.mrf.mxu0
    %v200 = vadd.f32 0.0, %v199
    %201 = vdwg.mxu0
    %203 = vrot.lane.b32.xlu0 %v143, 64
    %v204 = vpop.permute.xlu0 %203
    %v205 = vsel %vm162, %v137, 0
    %v207 = vsel %vm162, %v150, 0
    %v209 = vsel %vm162, %v154, 0
    %v211 = vsel %vm162, %v158, 0
    %v213 = vsel %vm162, %v204, 0
    %215 = vmatpush.xpose.msra.mxu0 0.0
    %216 = vmatpush.xpose.msra.mxu0 0.0
    %217 = vmatpush.xpose.msra.mxu0 0.0
    %218 = vmatpush.xpose.msra.mxu0 0.0
    %219 = vmatpush.xpose.msra.mxu0 0.0
    %220 = vmatpush.xpose.msra.mxu0 0.0
    %221 = vmatpush.xpose.msra.mxu0 0.0
    %222 = vmatpush.xpose.msra.mxu0 0.0
    %223 = vmatpush.xpose.msra.mxu0 0.0
    %224 = vmatpush.xpose.msra.mxu0 0.0
    %225 = vmatpush.xpose.msra.mxu0 0.0
    %226 = vmatpush.xpose.msra.mxu0 0.0
    %227 = vmatpush.xpose.msra.mxu0 0.0
    %228 = vmatpush.xpose.msra.mxu0 0.0
    %229 = vmatpush.xpose.msra.mxu0 0.0
    %230 = vmatpush.xpose.msra.mxu0 %v213
    %231 = vmatmul.f32.gmra.mxu0 %v205
    %v232 = vpop.f32.mrf.mxu0
    %v233 = vadd.f32 0.0, %v232
    %234 = vmatmul.f32.gmra.mxu0 %v207
    %v235 = vpop.f32.mrf.mxu0
    %v236 = vadd.f32 0.0, %v235
    %237 = vmatmul.f32.gmra.mxu0 %v209
    %v238 = vpop.f32.mrf.mxu0
    %v239 = vadd.f32 0.0, %v238
    %240 = vmatmul.f32.gmra.mxu0 %v211
    %v241 = vpop.f32.mrf.mxu0
    %v242 = vadd.f32 0.0, %v241
    %243 = vdwg.mxu0
    %vm244 = vcmask 64512
    %v245 = vsel %vm244, %v191, -inf
    %246 = vmax.xlane.f32.xlu0 %v245
    %v247 = vpop.xlane.xlu0 %246
    %v248 = vsel %vm244, %v194, -inf
    %249 = vmax.xlane.f32.xlu0 %v248
    %v250 = vpop.xlane.xlu0 %249
    %v251 = vsel %vm244, %v197, -inf
    %252 = vmax.xlane.f32.xlu0 %v251
    %v253 = vpop.xlane.xlu0 %252
    %v254 = vsel %vm244, %v200, -inf
    %255 = vmax.xlane.f32.xlu0 %v254
    %v256 = vpop.xlane.xlu0 %255
    %v257 = vsel %vm244, %v233, -inf
    %258 = vmax.xlane.f32.xlu0 %v257
    %v259 = vpop.xlane.xlu0 %258
    %v260 = vsel %vm244, %v236, -inf
    %261 = vmax.xlane.f32.xlu0 %v260
    %v262 = vpop.xlane.xlu0 %261
    %v263 = vsel %vm244, %v239, -inf
    %264 = vmax.xlane.f32.xlu0 %v263
    %v265 = vpop.xlane.xlu0 %264
    %v266 = vsel %vm244, %v242, -inf
    %267 = vmax.xlane.f32.xlu0 %v266
    %v268 = vpop.xlane.xlu0 %267
    %v269 = vsub.f32 %v191, %v247
    %v270 = vsub.f32 %v194, %v250
    %v271 = vsub.f32 %v197, %v253
    %v272 = vsub.f32 %v200, %v256
    %v273 = vsub.f32 %v233, %v259
    %v274 = vsub.f32 %v236, %v262
    %v275 = vsub.f32 %v239, %v265
    %v276 = vsub.f32 %v242, %v268
    %v277 = vmul.f32 %v269, 1.442695
    %v278 = vpow.pop %v277
    %v279 = vmul.f32 %v270, 1.442695
    %v280 = vpow.pop %v279
    %v281 = vmul.f32 %v271, 1.442695
    %v282 = vpow.pop %v281
    %v283 = vmul.f32 %v272, 1.442695
    %v284 = vpow.pop %v283
    %v285 = vmul.f32 %v273, 1.442695
    %v286 = vpow.pop %v285
    %v287 = vmul.f32 %v274, 1.442695
    %v288 = vpow.pop %v287
    %v289 = vmul.f32 %v275, 1.442695
    %v290 = vpow.pop %v289
    %v291 = vmul.f32 %v276, 1.442695
    %v292 = vpow.pop %v291
    %v293 = vsel %vm244, %v278, 0.0
    %294 = vadd.xlane.f32.xlu0 %v293
    %v295 = vpop.xlane.xlu0 %294
    %v296 = vsel %vm244, %v280, 0.0
    %297 = vadd.xlane.f32.xlu0 %v296
    %v298 = vpop.xlane.xlu0 %297
    %v299 = vsel %vm244, %v282, 0.0
    %300 = vadd.xlane.f32.xlu0 %v299
    %v301 = vpop.xlane.xlu0 %300
    %v302 = vsel %vm244, %v284, 0.0
    %303 = vadd.xlane.f32.xlu0 %v302
    %v304 = vpop.xlane.xlu0 %303
    %v305 = vsel %vm244, %v286, 0.0
    %306 = vadd.xlane.f32.xlu0 %v305
    %v307 = vpop.xlane.xlu0 %306
    %v308 = vsel %vm244, %v288, 0.0
    %309 = vadd.xlane.f32.xlu0 %v308
    %v310 = vpop.xlane.xlu0 %309
    %v311 = vsel %vm244, %v290, 0.0
    %312 = vadd.xlane.f32.xlu0 %v311
    %v313 = vpop.xlane.xlu0 %312
    %v314 = vsel %vm244, %v292, 0.0
    %315 = vadd.xlane.f32.xlu0 %v314
    %v316 = vpop.xlane.xlu0 %315
    %v317 = vrcp.pop %v295
    %v318 = vrcp.pop %v298
    %v319 = vrcp.pop %v301
    %v320 = vrcp.pop %v304
    %v321 = vrcp.pop %v307
    %v322 = vrcp.pop %v310
    %v323 = vrcp.pop %v313
    %v324 = vrcp.pop %v316
    %v325 = vmul.f32 %v278, %v317
    %v326 = vmul.f32 %v280, %v318
    %v327 = vmul.f32 %v282, %v319
    %v328 = vmul.f32 %v284, %v320
    %v329 = vmul.f32 %v286, %v321
    %v330 = vmul.f32 %v288, %v322
    %v331 = vmul.f32 %v290, %v323
    %v332 = vmul.f32 %v292, %v324
    %333 = vrot.lane.b32.xlu0 %v140, 48
    %v334 = vpop.permute.xlu0 %333
    %v337 = vsel %vm244, %v325, 0
    %v340 = vsel %vm244, %v326, 0
    %v343 = vsel %vm244, %v327, 0
    %v346 = vsel %vm244, %v328, 0
    %348 = vmatpush.msra.mxu0 0.0
    %349 = vmatpush.msra.mxu0 0.0
    %350 = vmatpush.msra.mxu0 0.0
    %351 = vmatpush.msra.mxu0 0.0
    %352 = vmatpush.msra.mxu0 0.0
    %353 = vmatpush.msra.mxu0 0.0
    %354 = vmatpush.msra.mxu0 0.0
    %355 = vmatpush.msra.mxu0 0.0
    %356 = vmatpush.msra.mxu0 0.0
    %357 = vmatpush.msra.mxu0 0.0
    %358 = vmatpush.msra.mxu0 0.0
    %359 = vmatpush.msra.mxu0 0.0
    %360 = vmatpush.msra.mxu0 0.0
    %361 = vmatpush.msra.mxu0 0.0
    %362 = vmatpush.msra.mxu0 0.0
    %363 = vmatpush.msra.mxu0 %v334
    %364 = vmatmul.f32.gmra.mxu0 %v337
    %v365 = vpop.f32.mrf.mxu0
    %v366 = vadd.f32 0.0, %v365
    %367 = vmatmul.f32.gmra.mxu0 %v340
    %v368 = vpop.f32.mrf.mxu0
    %v369 = vadd.f32 0.0, %v368
    %370 = vmatmul.f32.gmra.mxu0 %v343
    %v371 = vpop.f32.mrf.mxu0
    %v372 = vadd.f32 0.0, %v371
    %373 = vmatmul.f32.gmra.mxu0 %v346
    %v374 = vpop.f32.mrf.mxu0
    %v375 = vadd.f32 0.0, %v374
    %376 = vdwg.mxu0
    %377 = vrot.lane.b32.xlu0 %v143, 48
    %v378 = vpop.permute.xlu0 %377
    %v381 = vsel %vm244, %v329, 0
    %v384 = vsel %vm244, %v330, 0
    %v387 = vsel %vm244, %v331, 0
    %v390 = vsel %vm244, %v332, 0
    %392 = vmatpush.msra.mxu0 0.0
    %393 = vmatpush.msra.mxu0 0.0
    %394 = vmatpush.msra.mxu0 0.0
    %395 = vmatpush.msra.mxu0 0.0
    %396 = vmatpush.msra.mxu0 0.0
    %397 = vmatpush.msra.mxu0 0.0
    %398 = vmatpush.msra.mxu0 0.0
    %399 = vmatpush.msra.mxu0 0.0
    %400 = vmatpush.msra.mxu0 0.0
    %401 = vmatpush.msra.mxu0 0.0
    %402 = vmatpush.msra.mxu0 0.0
    %403 = vmatpush.msra.mxu0 0.0
    %404 = vmatpush.msra.mxu0 0.0
    %405 = vmatpush.msra.mxu0 0.0
    %406 = vmatpush.msra.mxu0 0.0
    %407 = vmatpush.msra.mxu0 %v378
    %408 = vmatmul.f32.gmra.mxu0 %v381
    %v409 = vpop.f32.mrf.mxu0
    %v410 = vadd.f32 0.0, %v409
    %411 = vmatmul.f32.gmra.mxu0 %v384
    %v412 = vpop.f32.mrf.mxu0
    %v413 = vadd.f32 0.0, %v412
    %414 = vmatmul.f32.gmra.mxu0 %v387
    %v415 = vpop.f32.mrf.mxu0
    %v416 = vadd.f32 0.0, %v415
    %417 = vmatmul.f32.gmra.mxu0 %v390
    %v418 = vpop.f32.mrf.mxu0
    %v419 = vadd.f32 0.0, %v418
    %420 = vdwg.mxu0
    %423 = vrot.lane.b32.xlu0 %v369, 16
    %v424 = vpop.permute.xlu0 %423
    %425 = vrot.lane.b32.xlu0 %v413, 16
    %v426 = vpop.permute.xlu0 %425
    %431 = vrot.lane.b32.xlu0 %v372, 32
    %v432 = vpop.permute.xlu0 %431
    %433 = vrot.lane.b32.xlu0 %v416, 32
    %v434 = vpop.permute.xlu0 %433
    %439 = vrot.lane.b32.xlu0 %v375, 48
    %v440 = vpop.permute.xlu0 %439
    %441 = vrot.lane.b32.xlu0 %v419, 48
    %v442 = vpop.permute.xlu0 %441
    %v445 = vsel %vm162, %v366, %v424
    %v446 = vsel %vm162, %v410, %v426
    %v447 = vsel %vm23, %v445, %v432
    %v448 = vsel %vm23, %v446, %v434
    %vm449 = vcmask 392192
    %v450 = vsel %vm449, %v447, %v440
    %v451 = vsel %vm449, %v448, %v442
    %v452 = vld [vmem:[%s4] sm:$0xff]
    %v453 = vld [vmem:[%s4 + $0x8] sm:$0xff]
    %v454 = vld [vmem:[%s4 + $0x10] sm:$0xff]
    %v455 = vld [vmem:[%s4 + $0x18] sm:$0xff]
    %v456 = vld [vmem:[%s4 + $0x20] sm:$0xff]
    %v457 = vld [vmem:[%s4 + $0x28] sm:$0xff]
    %v458 = vld [vmem:[%s4 + $0x30] sm:$0xff]
    %v459 = vld [vmem:[%s4 + $0x38] sm:$0xff]
    %v461 = vsel %vm103, %v450, 0
    %v464 = vsel %vm103, %v451, 0
    %466 = vmatpush.msra.mxu0 0.0
    %467 = vmatpush.msra.mxu0 0.0
    %468 = vmatpush.msra.mxu0 0.0
    %469 = vmatpush.msra.mxu0 0.0
    %470 = vmatpush.msra.mxu0 0.0
    %471 = vmatpush.msra.mxu0 0.0
    %472 = vmatpush.msra.mxu0 0.0
    %473 = vmatpush.msra.mxu0 0.0
    %474 = vmatpush.msra.mxu0 %v459
    %475 = vmatpush.msra.mxu0 %v458
    %476 = vmatpush.msra.mxu0 %v457
    %477 = vmatpush.msra.mxu0 %v456
    %478 = vmatpush.msra.mxu0 %v455
    %479 = vmatpush.msra.mxu0 %v454
    %480 = vmatpush.msra.mxu0 %v453
    %481 = vmatpush.msra.mxu0 %v452
    %482 = vmatmul.f32.gmra.mxu0 %v461
    %v483 = vpop.f32.mrf.mxu0
    %v484 = vadd.f32 0.0, %v483
    %485 = vmatmul.f32.gmra.mxu0 %v464
    %v486 = vpop.f32.mrf.mxu0
    %v487 = vadd.f32 0.0, %v486
    %488 = vdwg.mxu0
    %v491 = vrot.slane %v484, 1
    %v492 = vrot.slane %v487, 1
    %493 = vrot.lane.b32.xlu0 %v491, 32
    %v494 = vpop.permute.xlu0 %493
    %495 = vrot.lane.b32.xlu0 %v492, 32
    %v496 = vpop.permute.xlu0 %495
    %v499 = vrot.slane %v484, 2
    %v500 = vrot.slane %v487, 2
    %501 = vrot.lane.b32.xlu0 %v499, 64
    %v502 = vpop.permute.xlu0 %501
    %503 = vrot.lane.b32.xlu0 %v500, 64
    %v504 = vpop.permute.xlu0 %503
    %v507 = vrot.slane %v484, 3
    %v508 = vrot.slane %v487, 3
    %509 = vrot.lane.b32.xlu0 %v507, 96
    %v510 = vpop.permute.xlu0 %509
    %511 = vrot.lane.b32.xlu0 %v508, 96
    %v512 = vpop.permute.xlu0 %511
    %v515 = vrot.slane %v484, 4
    %v516 = vrot.slane %v487, 4
    %v519 = vrot.slane %v484, 5
    %v520 = vrot.slane %v487, 5
    %521 = vrot.lane.b32.xlu0 %v519, 32
    %v522 = vpop.permute.xlu0 %521
    %523 = vrot.lane.b32.xlu0 %v520, 32
    %v524 = vpop.permute.xlu0 %523
    %v527 = vrot.slane %v484, 6
    %v528 = vrot.slane %v487, 6
    %529 = vrot.lane.b32.xlu0 %v527, 64
    %v530 = vpop.permute.xlu0 %529
    %531 = vrot.lane.b32.xlu0 %v528, 64
    %v532 = vpop.permute.xlu0 %531
    %v535 = vrot.slane %v484, 7
    %v536 = vrot.slane %v487, 7
    %537 = vrot.lane.b32.xlu0 %v535, 96
    %v538 = vpop.permute.xlu0 %537
    %539 = vrot.lane.b32.xlu0 %v536, 96
    %v540 = vpop.permute.xlu0 %539
    %v543 = vsel %vm23, %v484, %v494
    %v544 = vsel %vm23, %v487, %v496
    %v545 = vsel %vm103, %v543, %v502
    %v546 = vsel %vm103, %v544, %v504
    %vm547 = vcmask 785408
    %v548 = vsel %vm547, %v545, %v510
    %v549 = vsel %vm547, %v546, %v512
    %v550 = vsel %vm23, %v515, %v522
    %v551 = vsel %vm23, %v516, %v524
    %v552 = vsel %vm103, %v550, %v530
    %v553 = vsel %vm103, %v551, %v532
    %v554 = vsel %vm547, %v552, %v538
    %v555 = vsel %vm547, %v553, %v540
    %v560 = vrot.slane %v554, 7
    %v561 = vrot.slane %v555, 7
    %vm562 = vcmask 1040384
    %v563 = vsel %vm562, %v548, %v560
    %v564 = vsel %vm562, %v549, %v561
    %v567 = vlaneseq
    %vm568 = vcmp.ge.s32.totalorder %v567, 0
    %vm569 = vcmp.lt.s32.totalorder %v567, 256
    %vm570 = vmand %vm568, %vm569
    %571 = vst.msk [vmem:[#allocation2] sm:$0x3] %vm570, %v563
    %572 = vst.msk [vmem:[#allocation2 + $0x2] sm:$0x3] %vm570, %v564
    // Predicated region
    $region22: #{tpu_custom_call.1} parent=1 // pred_check
      _
    $region23: #{tpu_custom_call.1} parent=1 // pred_check_branch
      %574 = sbr.rel (0) target = $region25
    $region24: #{tpu_custom_call.1} parent=1 // pred_region
      %576 = vsyncadd [#allocation3], 0
      %s577 = sshll.u32 [#allocation2], 4
      %s578 = int_to_ptr.vmem [resolvable:$true] %s577
      %s579 = sshll.u32 %s5, 4
      %s580 = int_to_ptr.hbm [resolvable:$true] %s579
      %585 = dma.vmem_to_hbm [thread:$0]  %s578, 64, %s580, [#allocation3], 32, 32, 2
    $region25: #{tpu_custom_call.1} parent=1 // pred_fallthru
      _
    // Predicated region
    $region26: #{tpu_custom_call.1} parent=1 // pred_check
      _
    $region27: #{tpu_custom_call.1} parent=1 // pred_check_branch
      %587 = sbr.rel (0) target = $region29
    $region28: #{tpu_custom_call.1} parent=1 // pred_region
      %589 = dma.done [#allocation3], 64
    $region29: #{tpu_custom_call.1} parent=1 // pred_fallthru
      _
    %590 = vsyncpa [#allocation3], 1

</llo_original>
